<compile_context>
chip_gen: v5e
topology: v5e:2x2
jax: 0.10.0
libtpu: 0.0.40
codegen_flags: <defaults>
</compile_context>

<pallas_src>
import functools

import jax
import jax.numpy as jnp
from jax.experimental import pallas as pl
from jax.experimental.pallas import tpu as pltpu


def sparse_xtoy_kernel(lo_ref, hi_ref,                       # scalar prefetch
                       x_ref, brow_ref, bcol_ref, w_ref, b_ref,   # inputs
                       o_ref,                                      # output
                       acc_ref, mm_ref,                            # scratch
                       *, gmax=None):
    t = pl.program_id(0)
    B = acc_ref.shape[0]
    dx = x_ref.shape[1]

    @pl.when(t == 0)
    def _init():
        acc_ref[...] = jnp.zeros_like(acc_ref)
        mm_ref[...] = jnp.full(mm_ref.shape, -jnp.inf, dtype=mm_ref.dtype)

    bcol = bcol_ref[...]                           # (TN, 1) i32 (padded == B)
    valid = bcol < B                               # (TN, 1) valid-row mask
    x = jnp.where(valid, x_ref[...], 0.0)          # zero ragged/OOB rows
    brow = brow_ref[...]                           # (1, TN) i32

    # --- fused segment sum / sq-sum / count: one MXU contraction ----------
    iota_g = jax.lax.broadcasted_iota(jnp.int32, (B, brow.shape[1]), 0)
    onehot = (iota_g == brow).astype(jnp.float32)  # (B, TN); padded never match
    ones = jnp.ones((x.shape[0], 1), jnp.float32)
    rhs = jnp.concatenate([x, x * x, ones], axis=1)            # (TN, 2dx+1)
    acc_ref[...] += jnp.dot(onehot, rhs, preferred_element_type=jnp.float32)

    # --- segment min/max: max over [x | -x], only graphs in this tile -----
    xx = jnp.concatenate([x, -x], axis=1)                      # (TN, 2dx)
    g_lo = lo_ref[t]
    g_hi = hi_ref[t]

    def update(g):
        mask = bcol == g                                       # (TN, 1)
        v = jnp.max(jnp.where(mask, xx, -jnp.inf), axis=0, keepdims=True)
        mm_ref[pl.ds(g, 1), :] = jnp.maximum(mm_ref[pl.ds(g, 1), :], v)

    if gmax is None:
        def body(g, carry):
            update(g)
            return carry
        jax.lax.fori_loop(g_lo, g_hi + 1, body, 0)
    else:
        # Fixed-trip, unrolled, guarded loop (scheduler-visible).
        for k in range(gmax):
            @pl.when(g_lo + k <= g_hi)
            def _(k=k):
                update(g_lo + k)

    # --- finalize: stats + single (B, 4dx) @ (4dx, dy) Linear --------------
    @pl.when(t == pl.num_programs(0) - 1)
    def _finalize():
        acc = acc_ref[...]                                     # (B, 2dx+1)
        cnt = acc[:, 2 * dx:2 * dx + 1]                        # (B, 1)
        inv = 1.0 / jnp.maximum(cnt, 1.0)                      # empty-graph guard
        mean = acc[:, :dx] * inv
        var = jnp.maximum(acc[:, dx:2 * dx] * inv - mean * mean, 0.0)
        mm = mm_ref[...]                                       # (B, 2dx)
        has = cnt > 0.0
        mx = jnp.where(has, mm[:, :dx], 0.0)
        mn = jnp.where(has, -mm[:, dx:], 0.0)
        z = jnp.concatenate([mean, mn, mx, var], axis=1)       # (B, 4dx)
        out = (jnp.dot(z, w_ref[...], preferred_element_type=jnp.float32)
               + b_ref[...])                                   # (B, dy)
        o_ref[...] = out.astype(o_ref.dtype)


@functools.partial(jax.jit,
                   static_argnames=("num_graphs", "max_graphs_per_tile"))
def sparse_xtoy(X, batch, W, bias, *, num_graphs, max_graphs_per_tile=None):
    """X: (N, dx), batch: (N,) int (sorted per graph, as in PyG batching),
       W: (4*dx, dy) so out = z @ W + bias, bias: (dy,).
       `max_graphs_per_tile` (static, optional) must be an UPPER bound on the
       number of distinct graphs in any node tile; enables loop unrolling."""
    N, dx = X.shape
    dy = W.shape[1]
    assert W.shape[0] == 4 * dx
    B = num_graphs

    if X.dtype != jnp.float32:
        X = X.astype(jnp.float32)
    batch = batch.astype(jnp.int32)

    # Node tile: single (8-rounded) tile if N is small; otherwise a multiple
    # of 128 (required by the (1, TN) batch-row BlockSpec) sized to VMEM.
    if N <= 1024:
        TN = max(8, ((N + 7) // 8) * 8)
    else:
        TN = 1024
        while TN > 128 and 2 * TN * dx * 4 > 16 * 1024 * 1024:
            TN //= 2
    num_tiles = (N + TN - 1) // TN
    Npad = num_tiles * TN
    pad = Npad - N

    # Only `batch` is padded (tiny); X itself is streamed without a copy.
    bp = batch if pad == 0 else jnp.concatenate(
        [batch, jnp.full((pad,), B, jnp.int32)])
    brow = bp.reshape(1, Npad)            # lane-axis nodes, for the one-hot
    bcol = bp.reshape(Npad, 1)            # sublane-axis nodes, for min/max

    # Per-tile graph-id range (scalar prefetch -> SMEM); batch is sorted.
    starts = jnp.arange(num_tiles, dtype=jnp.int32) * TN
    last_real = jnp.minimum(starts + TN - 1, N - 1)
    tile_lo = batch[starts]
    tile_hi = batch[last_real]

    Wf = W.astype(jnp.float32)                       # flat (4dx, dy)
    bias2d = bias.astype(jnp.float32).reshape(1, dy)

    kernel = functools.partial(sparse_xtoy_kernel, gmax=max_graphs_per_tile)

    flops = 2 * B * Npad * (2 * dx + 1) + 2 * B * 4 * dx * dy
    bytes_accessed = (N * dx * 4 + 2 * Npad * 4 + 4 * dx * dy * 4
                      + dy * 4 + B * dy * 4)

    # Rough VMEM footprint -> scoped limit (cap at 64 MiB for v7x safety).
    est = (2 * TN * dx * 4 + 2 * TN * 128 * 4 + 2 * 8 * TN * 4
           + 2 * 4 * dx * dy * 4 + 2 * 128 * dy * 4 + B * dy * 4
           + B * (4 * dx + 1) * 4 + B * TN * 4 + TN * (2 * dx + 128) * 4)
    vmem_limit = int(min(64 * 1024 * 1024, max(32 * 1024 * 1024, 2 * est)))

    return pl.pallas_call(
        kernel,
        out_shape=jax.ShapeDtypeStruct((B, dy), jnp.float32),
        grid_spec=pltpu.PrefetchScalarGridSpec(
            num_scalar_prefetch=2,
            grid=(num_tiles,),
            in_specs=[
                pl.BlockSpec((TN, dx), lambda t, lo, hi: (t, 0)),        # X
                pl.BlockSpec((1, TN), lambda t, lo, hi: (0, t)),         # batch row
                pl.BlockSpec((TN, 1), lambda t, lo, hi: (t, 0)),         # batch col
                pl.BlockSpec((4 * dx, dy), lambda t, lo, hi: (0, 0)),    # W (flat)
                pl.BlockSpec((1, dy), lambda t, lo, hi: (0, 0)),         # bias
            ],
            out_specs=pl.BlockSpec((B, dy), lambda t, lo, hi: (0, 0)),
            scratch_shapes=[
                pltpu.VMEM((B, 2 * dx + 1), jnp.float32),   # [sum | sq | cnt]
                pltpu.VMEM((B, 2 * dx), jnp.float32),       # [max | -min]
            ]),
        compiler_params=pltpu.CompilerParams(
            dimension_semantics=("arbitrary",),
            vmem_limit_bytes=vmem_limit),
        cost_estimate=pl.CostEstimate(
            flops=flops, transcendentals=0, bytes_accessed=bytes_accessed),
    )(tile_lo, tile_hi, X, brow, bcol, Wf, bias2d)


def sparse_xtoy_ref(X, batch, W, bias, num_graphs):
    """Pure-JAX reference mirroring the PyTorch forward."""
    batch = batch.astype(jnp.int32)
    counts = jax.ops.segment_sum(jnp.ones((X.shape[0],), jnp.float32), batch,
                                 num_segments=num_graphs)[:, None]
    m = jax.ops.segment_sum(X, batch, num_segments=num_graphs) / counts
    mi = -jax.ops.segment_max(-X, batch, num_segments=num_graphs)
    ma = jax.ops.segment_max(X, batch, num_segments=num_graphs)
    dev = X - m[batch]
    std = jax.ops.segment_sum(dev * dev, batch, num_segments=num_graphs) / counts
    z = jnp.concatenate([m, mi, ma, std], axis=-1)
    return z @ W + bias


if __name__ == "__main__":
    # Small synthetic problem: 19 nodes, 4 graphs (sizes 6,5,4,4), dx=8, dy=16.
    # N=19 deliberately exercises the ragged (masked) last-tile path.
    dx, dy, B = 8, 16, 4
    sizes = [6, 5, 4, 4]
    N = sum(sizes)

    key = jax.random.PRNGKey(0)
    kx, kw, kb = jax.random.split(key, 3)

    X = jax.random.normal(kx, (N, dx), dtype=jnp.float32)
    batch = jnp.repeat(jnp.arange(B, dtype=jnp.int32),
                       jnp.array(sizes, dtype=jnp.int32))        # sorted (PyG)

    # Deterministic "Linear(4*dx, dy)" parameters stored as (4*dx, dy)
    # so that out = z @ W + bias (same math as torch's z @ weight.T + bias).
    bound = 1.0 / jnp.sqrt(4.0 * dx)
    W = jax.random.uniform(kw, (4 * dx, dy), jnp.float32, -bound, bound)
    bias = jax.random.uniform(kb, (dy,), jnp.float32, -bound, bound)

    out = sparse_xtoy(X, batch, W, bias, num_graphs=B, max_graphs_per_tile=B)
    jax.block_until_ready(out)

    ref = sparse_xtoy_ref(X, batch, W, bias, B)
    assert out.shape == (B, dy)
    assert jnp.allclose(out, ref, atol=1e-5, rtol=1e-5), (out, ref)

    print("KERNEL_OK")
</pallas_src>

<mosaic_0001>
module attributes {stable_mosaic.version = 11 : i64} {
  func.func @sparse_xtoy_kernel(%arg0: i32, %arg1: memref<1xi32, #tpu.memory_space<smem>>, %arg2: memref<1xi32, #tpu.memory_space<smem>>, %arg3: memref<24x8xf32, #tpu.memory_space<vmem>>, %arg4: memref<1x24xi32, #tpu.memory_space<vmem>>, %arg5: memref<24x1xi32, #tpu.memory_space<vmem>>, %arg6: memref<32x16xf32, #tpu.memory_space<vmem>>, %arg7: memref<1x16xf32, #tpu.memory_space<vmem>>, %arg8: memref<4x16xf32, #tpu.memory_space<vmem>>, %arg9: memref<4x17xf32, #tpu.memory_space<vmem>>, %arg10: memref<4x16xf32, #tpu.memory_space<vmem>>) attributes {dimension_semantics = [#tpu.dimension_semantics<arbitrary>], iteration_bounds = array<i64: 1>, scalar_prefetch = 2 : i64, scratch_operands = 2 : i64, tpu.core_type = #tpu.core_type<tc>, window_params = [{transform_indices = @transform_0, window_bounds = array<i64: 24, 8>}, {transform_indices = @transform_1, window_bounds = array<i64: 1, 24>}, {transform_indices = @transform_2, window_bounds = array<i64: 24, 1>}, {pipeline_mode = #tpu.pipeline_mode<synchronous>, transform_indices = @transform_3, window_bounds = array<i64: 32, 16>}, {pipeline_mode = #tpu.pipeline_mode<synchronous>, transform_indices = @transform_4, window_bounds = array<i64: 1, 16>}, {pipeline_mode = #tpu.pipeline_mode<synchronous>, transform_indices = @transform_5, window_bounds = array<i64: 4, 16>}]} {
    %c0_i32 = arith.constant 0 : i32
    %0 = arith.cmpi eq, %arg0, %c0_i32 : i32
    %1 = arith.extui %0 : i1 to i32
    %c0_i32_0 = arith.constant 0 : i32
    %2 = arith.cmpi ne, %1, %c0_i32_0 : i32
    scf.if %2 {
      %cst_20 = arith.constant 0.000000e+00 : f32
      %50 = vector.broadcast %cst_20 : f32 to vector<4x17xf32>
      %c0_21 = arith.constant 0 : index
      %c0_22 = arith.constant 0 : index
      %51 = vector.load %arg9[%c0_21, %c0_22] : memref<4x17xf32, #tpu.memory_space<vmem>>, vector<4x17xf32>
      tpu.vector_store %arg9[%c0_21, %c0_22], %50 {strides = array<i32>} : memref<4x17xf32, #tpu.memory_space<vmem>>, vector<4x17xf32>,
      %cst_23 = arith.constant 0xFF800000 : f32
      %52 = vector.broadcast %cst_23 : f32 to vector<4x16xf32>
      %c0_24 = arith.constant 0 : index
      %c0_25 = arith.constant 0 : index
      %53 = vector.load %arg10[%c0_24, %c0_25] : memref<4x16xf32, #tpu.memory_space<vmem>>, vector<4x16xf32>
      tpu.vector_store %arg10[%c0_24, %c0_25], %52 {strides = array<i32>} : memref<4x16xf32, #tpu.memory_space<vmem>>, vector<4x16xf32>,
    } else {
    }
    %c0 = arith.constant 0 : index
    %c0_1 = arith.constant 0 : index
    %3 = vector.load %arg5[%c0, %c0_1] : memref<24x1xi32, #tpu.memory_space<vmem>>, vector<24x1xi32>
    %c4_i32 = arith.constant 4 : i32
    %4 = vector.broadcast %c4_i32 : i32 to vector<24x1xi32>
    %5 = arith.cmpi slt, %3, %4 : vector<24x1xi32>
    %c0_2 = arith.constant 0 : index
    %c0_3 = arith.constant 0 : index
    %6 = vector.load %arg3[%c0_2, %c0_3] : memref<24x8xf32, #tpu.memory_space<vmem>>, vector<24x8xf32>
    %cst = arith.constant 0.000000e+00 : f32
    %7 = vector.shape_cast %5 : vector<24x1xi1> to vector<24x1xi1>
    %8 = vector.broadcast %7 : vector<24x1xi1> to vector<24x8xi1>
    %9 = vector.broadcast %cst : f32 to vector<24x8xf32>
    %10 = arith.select %8, %6, %9 : vector<24x8xi1>, vector<24x8xf32>
    %c0_4 = arith.constant 0 : index
    %c0_5 = arith.constant 0 : index
    %11 = vector.load %arg4[%c0_4, %c0_5] : memref<1x24xi32, #tpu.memory_space<vmem>>, vector<1x24xi32>
    %12 = tpu.iota {dimensions = array<i32: 0>} : vector<4x24xi32>
    %13 = vector.broadcast %11 : vector<1x24xi32> to vector<4x24xi32>
    %14 = arith.cmpi eq, %12, %13 : vector<4x24xi32>
    %15 = arith.extui %14 : vector<4x24xi1> to vector<4x24xi32>
    %16 = arith.sitofp %15 : vector<4x24xi32> to vector<4x24xf32>
    %cst_6 = arith.constant 1.000000e+00 : f32
    %17 = vector.broadcast %cst_6 : f32 to vector<24x1xf32>
    %18 = arith.mulf %10, %10 : vector<24x8xf32>
    %19 = tpu.concatenate %10, %18, %17 in 1 : vector<24x8xf32>, vector<24x8xf32>, vector<24x1xf32> -> vector<24x17xf32>
    %c0_7 = arith.constant 0 : index
    %c0_8 = arith.constant 0 : index
    %20 = vector.load %arg9[%c0_7, %c0_8] : memref<4x17xf32, #tpu.memory_space<vmem>>, vector<4x17xf32>
    %cst_9 = arith.constant dense<0.000000e+00> : vector<4x17xf32>
    %21 = tpu.matmul %16, %19, %cst_9 {dimension_numbers = #tpu.dot_dimension_numbers<[1], [0], [0], [1], [0, 0, 1, 1], [], []>} : vector<4x24xf32>, vector<24x17xf32>, vector<4x17xf32> -> vector<4x17xf32>
    %22 = arith.addf %20, %21 : vector<4x17xf32>
    %c0_10 = arith.constant 0 : index
    %c0_11 = arith.constant 0 : index
    %23 = vector.load %arg9[%c0_10, %c0_11] : memref<4x17xf32, #tpu.memory_space<vmem>>, vector<4x17xf32>
    tpu.vector_store %arg9[%c0_10, %c0_11], %22 {strides = array<i32>} : memref<4x17xf32, #tpu.memory_space<vmem>>, vector<4x17xf32>,
    %cst_12 = arith.constant 0.000000e+00 : f32
    %24 = vector.broadcast %cst_12 : f32 to vector<24x8xf32>
    %25 = arith.subf %24, %10 : vector<24x8xf32>
    %26 = tpu.concatenate %10, %25 in 1 : vector<24x8xf32>, vector<24x8xf32> -> vector<24x16xf32>
    %27 = arith.index_cast %arg0 : i32 to index
    %28 = memref.load %arg1[%27] : memref<1xi32, #tpu.memory_space<smem>>
    %29 = arith.index_cast %arg0 : i32 to index
    %30 = memref.load %arg2[%29] : memref<1xi32, #tpu.memory_space<smem>>
    %c0_i32_13 = arith.constant 0 : i32
    %31 = arith.addi %28, %c0_i32_13 : i32
    %32 = arith.cmpi sle, %31, %30 : i32
    %33 = arith.extui %32 : i1 to i32
    %c0_i32_14 = arith.constant 0 : i32
    %34 = arith.cmpi ne, %33, %c0_i32_14 : i32
    scf.if %34 {
      %c0_i32_20 = arith.constant 0 : i32
      %50 = arith.addi %28, %c0_i32_20 : i32
      %51 = vector.broadcast %50 : i32 to vector<24x1xi32>
      %52 = arith.cmpi eq, %3, %51 : vector<24x1xi32>
      %cst_21 = arith.constant 0xFF800000 : f32
      %53 = vector.shape_cast %52 : vector<24x1xi1> to vector<24x1xi1>
      %54 = vector.broadcast %53 : vector<24x1xi1> to vector<24x16xi1>
      %55 = vector.broadcast %cst_21 : f32 to vector<24x16xf32>
      %56 = arith.select %54, %26, %55 : vector<24x16xi1>, vector<24x16xf32>
      %cst_22 = arith.constant dense<0xFF800000> : vector<16xf32>
      %57 = vector.multi_reduction <maximumf>, %56, %cst_22 [0] : vector<24x16xf32> to vector<16xf32>
      %58 = vector.shape_cast %57 : vector<16xf32> to vector<1x16xf32>
      %59 = arith.index_cast %50 : i32 to index
      %c0_23 = arith.constant 0 : index
      %60 = vector.load %arg10[%59, %c0_23] : memref<4x16xf32, #tpu.memory_space<vmem>>, vector<1x16xf32>
      %61 = arith.maximumf %60, %58 : vector<1x16xf32>
      %62 = arith.index_cast %50 : i32 to index
      %c0_24 = arith.constant 0 : index
      %63 = vector.load %arg10[%62, %c0_24] : memref<4x16xf32, #tpu.memory_space<vmem>>, vector<1x16xf32>
      tpu.vector_store %arg10[%62, %c0_24], %61 {strides = array<i32>} : memref<4x16xf32, #tpu.memory_space<vmem>>, vector<1x16xf32>,
    } else {
    }
    %c1_i32 = arith.constant 1 : i32
    %35 = arith.addi %28, %c1_i32 : i32
    %36 = arith.cmpi sle, %35, %30 : i32
    %37 = arith.extui %36 : i1 to i32
    %c0_i32_15 = arith.constant 0 : i32
    %38 = arith.cmpi ne, %37, %c0_i32_15 : i32
    scf.if %38 {
      %c1_i32_20 = arith.constant 1 : i32
      %50 = arith.addi %28, %c1_i32_20 : i32
      %51 = vector.broadcast %50 : i32 to vector<24x1xi32>
      %52 = arith.cmpi eq, %3, %51 : vector<24x1xi32>
      %cst_21 = arith.constant 0xFF800000 : f32
      %53 = vector.shape_cast %52 : vector<24x1xi1> to vector<24x1xi1>
      %54 = vector.broadcast %53 : vector<24x1xi1> to vector<24x16xi1>
      %55 = vector.broadcast %cst_21 : f32 to vector<24x16xf32>
      %56 = arith.select %54, %26, %55 : vector<24x16xi1>, vector<24x16xf32>
      %cst_22 = arith.constant dense<0xFF800000> : vector<16xf32>
      %57 = vector.multi_reduction <maximumf>, %56, %cst_22 [0] : vector<24x16xf32> to vector<16xf32>
      %58 = vector.shape_cast %57 : vector<16xf32> to vector<1x16xf32>
      %59 = arith.index_cast %50 : i32 to index
      %c0_23 = arith.constant 0 : index
      %60 = vector.load %arg10[%59, %c0_23] : memref<4x16xf32, #tpu.memory_space<vmem>>, vector<1x16xf32>
      %61 = arith.maximumf %60, %58 : vector<1x16xf32>
      %62 = arith.index_cast %50 : i32 to index
      %c0_24 = arith.constant 0 : index
      %63 = vector.load %arg10[%62, %c0_24] : memref<4x16xf32, #tpu.memory_space<vmem>>, vector<1x16xf32>
      tpu.vector_store %arg10[%62, %c0_24], %61 {strides = array<i32>} : memref<4x16xf32, #tpu.memory_space<vmem>>, vector<1x16xf32>,
    } else {
    }
    %c2_i32 = arith.constant 2 : i32
    %39 = arith.addi %28, %c2_i32 : i32
    %40 = arith.cmpi sle, %39, %30 : i32
    %41 = arith.extui %40 : i1 to i32
    %c0_i32_16 = arith.constant 0 : i32
    %42 = arith.cmpi ne, %41, %c0_i32_16 : i32
    scf.if %42 {
      %c2_i32_20 = arith.constant 2 : i32
      %50 = arith.addi %28, %c2_i32_20 : i32
      %51 = vector.broadcast %50 : i32 to vector<24x1xi32>
      %52 = arith.cmpi eq, %3, %51 : vector<24x1xi32>
      %cst_21 = arith.constant 0xFF800000 : f32
      %53 = vector.shape_cast %52 : vector<24x1xi1> to vector<24x1xi1>
      %54 = vector.broadcast %53 : vector<24x1xi1> to vector<24x16xi1>
      %55 = vector.broadcast %cst_21 : f32 to vector<24x16xf32>
      %56 = arith.select %54, %26, %55 : vector<24x16xi1>, vector<24x16xf32>
      %cst_22 = arith.constant dense<0xFF800000> : vector<16xf32>
      %57 = vector.multi_reduction <maximumf>, %56, %cst_22 [0] : vector<24x16xf32> to vector<16xf32>
      %58 = vector.shape_cast %57 : vector<16xf32> to vector<1x16xf32>
      %59 = arith.index_cast %50 : i32 to index
      %c0_23 = arith.constant 0 : index
      %60 = vector.load %arg10[%59, %c0_23] : memref<4x16xf32, #tpu.memory_space<vmem>>, vector<1x16xf32>
      %61 = arith.maximumf %60, %58 : vector<1x16xf32>
      %62 = arith.index_cast %50 : i32 to index
      %c0_24 = arith.constant 0 : index
      %63 = vector.load %arg10[%62, %c0_24] : memref<4x16xf32, #tpu.memory_space<vmem>>, vector<1x16xf32>
      tpu.vector_store %arg10[%62, %c0_24], %61 {strides = array<i32>} : memref<4x16xf32, #tpu.memory_space<vmem>>, vector<1x16xf32>,
    } else {
    }
    %c3_i32 = arith.constant 3 : i32
    %43 = arith.addi %28, %c3_i32 : i32
    %44 = arith.cmpi sle, %43, %30 : i32
    %45 = arith.extui %44 : i1 to i32
    %c0_i32_17 = arith.constant 0 : i32
    %46 = arith.cmpi ne, %45, %c0_i32_17 : i32
    scf.if %46 {
      %c3_i32_20 = arith.constant 3 : i32
      %50 = arith.addi %28, %c3_i32_20 : i32
      %51 = vector.broadcast %50 : i32 to vector<24x1xi32>
      %52 = arith.cmpi eq, %3, %51 : vector<24x1xi32>
      %cst_21 = arith.constant 0xFF800000 : f32
      %53 = vector.shape_cast %52 : vector<24x1xi1> to vector<24x1xi1>
      %54 = vector.broadcast %53 : vector<24x1xi1> to vector<24x16xi1>
      %55 = vector.broadcast %cst_21 : f32 to vector<24x16xf32>
      %56 = arith.select %54, %26, %55 : vector<24x16xi1>, vector<24x16xf32>
      %cst_22 = arith.constant dense<0xFF800000> : vector<16xf32>
      %57 = vector.multi_reduction <maximumf>, %56, %cst_22 [0] : vector<24x16xf32> to vector<16xf32>
      %58 = vector.shape_cast %57 : vector<16xf32> to vector<1x16xf32>
      %59 = arith.index_cast %50 : i32 to index
      %c0_23 = arith.constant 0 : index
      %60 = vector.load %arg10[%59, %c0_23] : memref<4x16xf32, #tpu.memory_space<vmem>>, vector<1x16xf32>
      %61 = arith.maximumf %60, %58 : vector<1x16xf32>
      %62 = arith.index_cast %50 : i32 to index
      %c0_24 = arith.constant 0 : index
      %63 = vector.load %arg10[%62, %c0_24] : memref<4x16xf32, #tpu.memory_space<vmem>>, vector<1x16xf32>
      tpu.vector_store %arg10[%62, %c0_24], %61 {strides = array<i32>} : memref<4x16xf32, #tpu.memory_space<vmem>>, vector<1x16xf32>,
    } else {
    }
    %c0_i32_18 = arith.constant 0 : i32
    %47 = arith.cmpi eq, %arg0, %c0_i32_18 : i32
    %48 = arith.extui %47 : i1 to i32
    %c0_i32_19 = arith.constant 0 : i32
    %49 = arith.cmpi ne, %48, %c0_i32_19 : i32
    scf.if %49 {
      %c0_20 = arith.constant 0 : index
      %c0_21 = arith.constant 0 : index
      %50 = vector.load %arg9[%c0_20, %c0_21] : memref<4x17xf32, #tpu.memory_space<vmem>>, vector<4x17xf32>
      %51 = vector.extract_strided_slice %50 {offsets = [0, 16], sizes = [4, 1], strides = [1, 1]} : vector<4x17xf32> to vector<4x1xf32>
      %cst_22 = arith.constant 1.000000e+00 : f32
      %52 = vector.broadcast %cst_22 : f32 to vector<4x1xf32>
      %53 = arith.maximumf %51, %52 : vector<4x1xf32>
      %cst_23 = arith.constant 1.000000e+00 : f32
      %54 = vector.broadcast %cst_23 : f32 to vector<4x1xf32>
      %55 = arith.divf %54, %53 : vector<4x1xf32>
      %56 = vector.extract_strided_slice %50 {offsets = [0, 0], sizes = [4, 8], strides = [1, 1]} : vector<4x17xf32> to vector<4x8xf32>
      %57 = vector.broadcast %55 : vector<4x1xf32> to vector<4x8xf32>
      %58 = arith.mulf %56, %57 : vector<4x8xf32>
      %59 = vector.extract_strided_slice %50 {offsets = [0, 8], sizes = [4, 8], strides = [1, 1]} : vector<4x17xf32> to vector<4x8xf32>
      %60 = vector.broadcast %55 : vector<4x1xf32> to vector<4x8xf32>
      %61 = arith.mulf %59, %60 : vector<4x8xf32>
      %62 = arith.mulf %58, %58 : vector<4x8xf32>
      %63 = arith.subf %61, %62 : vector<4x8xf32>
      %cst_24 = arith.constant 0.000000e+00 : f32
      %64 = vector.broadcast %cst_24 : f32 to vector<4x8xf32>
      %65 = arith.maximumf %63, %64 : vector<4x8xf32>
      %c0_25 = arith.constant 0 : index
      %c0_26 = arith.constant 0 : index
      %66 = vector.load %arg10[%c0_25, %c0_26] : memref<4x16xf32, #tpu.memory_space<vmem>>, vector<4x16xf32>
      %cst_27 = arith.constant 0.000000e+00 : f32
      %67 = vector.broadcast %cst_27 : f32 to vector<4x1xf32>
      %68 = arith.cmpf ogt, %51, %67 : vector<4x1xf32>
      %69 = vector.extract_strided_slice %66 {offsets = [0, 0], sizes = [4, 8], strides = [1, 1]} : vector<4x16xf32> to vector<4x8xf32>
      %cst_28 = arith.constant 0.000000e+00 : f32
      %70 = vector.shape_cast %68 : vector<4x1xi1> to vector<4x1xi1>
      %71 = vector.broadcast %70 : vector<4x1xi1> to vector<4x8xi1>
      %72 = vector.broadcast %cst_28 : f32 to vector<4x8xf32>
      %73 = arith.select %71, %69, %72 : vector<4x8xi1>, vector<4x8xf32>
      %74 = vector.extract_strided_slice %66 {offsets = [0, 8], sizes = [4, 8], strides = [1, 1]} : vector<4x16xf32> to vector<4x8xf32>
      %cst_29 = arith.constant 0.000000e+00 : f32
      %75 = vector.broadcast %cst_29 : f32 to vector<4x8xf32>
      %76 = arith.subf %75, %74 : vector<4x8xf32>
      %cst_30 = arith.constant 0.000000e+00 : f32
      %77 = vector.shape_cast %68 : vector<4x1xi1> to vector<4x1xi1>
      %78 = vector.broadcast %77 : vector<4x1xi1> to vector<4x8xi1>
      %79 = vector.broadcast %cst_30 : f32 to vector<4x8xf32>
      %80 = arith.select %78, %76, %79 : vector<4x8xi1>, vector<4x8xf32>
      %81 = tpu.concatenate %58, %80, %73, %65 in 1 : vector<4x8xf32>, vector<4x8xf32>, vector<4x8xf32>, vector<4x8xf32> -> vector<4x32xf32>
      %c0_31 = arith.constant 0 : index
      %c0_32 = arith.constant 0 : index
      %82 = vector.load %arg6[%c0_31, %c0_32] : memref<32x16xf32, #tpu.memory_space<vmem>>, vector<32x16xf32>
      %cst_33 = arith.constant dense<0.000000e+00> : vector<4x16xf32>
      %83 = tpu.matmul %81, %82, %cst_33 {dimension_numbers = #tpu.dot_dimension_numbers<[1], [0], [0], [1], [0, 0, 1, 1], [], []>} : vector<4x32xf32>, vector<32x16xf32>, vector<4x16xf32> -> vector<4x16xf32>
      %c0_34 = arith.constant 0 : index
      %c0_35 = arith.constant 0 : index
      %84 = vector.load %arg7[%c0_34, %c0_35] : memref<1x16xf32, #tpu.memory_space<vmem>>, vector<1x16xf32>
      %85 = vector.broadcast %84 : vector<1x16xf32> to vector<4x16xf32>
      %86 = arith.addf %83, %85 : vector<4x16xf32>
      %c0_36 = arith.constant 0 : index
      %c0_37 = arith.constant 0 : index
      %87 = vector.load %arg8[%c0_36, %c0_37] : memref<4x16xf32, #tpu.memory_space<vmem>>, vector<4x16xf32>
      tpu.vector_store %arg8[%c0_36, %c0_37], %86 {strides = array<i32>} : memref<4x16xf32, #tpu.memory_space<vmem>>, vector<4x16xf32>,
    } else {
    }
    return
  }
  func.func @transform_0(%arg0: i32, %arg1: memref<1xi32, #tpu.memory_space<smem>>, %arg2: memref<1xi32, #tpu.memory_space<smem>>) -> (i32, i32) {
    %c0_i32 = arith.constant 0 : i32
    %c0_i32_0 = arith.constant 0 : i32
    return %arg0, %c0_i32 : i32, i32
  }
  func.func @transform_1(%arg0: i32, %arg1: memref<1xi32, #tpu.memory_space<smem>>, %arg2: memref<1xi32, #tpu.memory_space<smem>>) -> (i32, i32) {
    %c0_i32 = arith.constant 0 : i32
    %c0_i32_0 = arith.constant 0 : i32
    return %c0_i32, %arg0 : i32, i32
  }
  func.func @transform_2(%arg0: i32, %arg1: memref<1xi32, #tpu.memory_space<smem>>, %arg2: memref<1xi32, #tpu.memory_space<smem>>) -> (i32, i32) {
    %c0_i32 = arith.constant 0 : i32
    %c0_i32_0 = arith.constant 0 : i32
    return %arg0, %c0_i32 : i32, i32
  }
  func.func @transform_3(%arg0: i32, %arg1: memref<1xi32, #tpu.memory_space<smem>>, %arg2: memref<1xi32, #tpu.memory_space<smem>>) -> (i32, i32) {
    %c0_i32 = arith.constant 0 : i32
    %c0_i32_0 = arith.constant 0 : i32
    %c0_i32_1 = arith.constant 0 : i32
    return %c0_i32, %c0_i32_0 : i32, i32
  }
  func.func @transform_4(%arg0: i32, %arg1: memref<1xi32, #tpu.memory_space<smem>>, %arg2: memref<1xi32, #tpu.memory_space<smem>>) -> (i32, i32) {
    %c0_i32 = arith.constant 0 : i32
    %c0_i32_0 = arith.constant 0 : i32
    %c0_i32_1 = arith.constant 0 : i32
    return %c0_i32, %c0_i32_0 : i32, i32
  }
  func.func @transform_5(%arg0: i32, %arg1: memref<1xi32, #tpu.memory_space<smem>>, %arg2: memref<1xi32, #tpu.memory_space<smem>>) -> (i32, i32) {
    %c0_i32 = arith.constant 0 : i32
    %c0_i32_0 = arith.constant 0 : i32
    %c0_i32_1 = arith.constant 0 : i32
    return %c0_i32, %c0_i32_0 : i32, i32
  }
}

</mosaic_0001>

<llo_original>
// kernel: sparse_xtoy.1
$region0: #{sparse_xtoy.1}
  #allocation0 [shape = 'u32[]', space=smem, size = 0x4, offset = 0x4, fixed_abs, tag = 'smem constant byte address 0x4 - core index']
  #allocation1 [shape = 'u32[72,128]{1,0:T(1,128)}', space=vmem, size = 0x9000, scoped, tag = 'internal scratch']
  #allocation2 [shape = 'f32[4,17]{1,0:T(4,128)}', space=vmem, size = 0x800, scoped, tag = 'scratch operand']
  #allocation3 [shape = 'f32[4,16]{1,0:T(4,128)}', space=vmem, size = 0x800, scoped, tag = 'scratch operand']
  #allocation4 [shape = 's32[1]{0}', space=sflag, size = 0x4, scoped, tag = 'scoped memory for sparse_xtoy.1']
  #allocation5 [shape = 's32[1]{0:T(128)S(6)}', space=smem, size = 0x200, scoped, tag = 'prefetched SMEM operand 0']
  #allocation6 [shape = 's32[1]{0:T(128)S(6)}', space=smem, size = 0x200, scoped, tag = 'prefetched SMEM operand 1']
  %s0 = inlined_call_operand.<no memory space> [shape: s32[1], index: 0, kind: input, shape index: {}]
  %s1 = inlined_call_operand.<no memory space> [shape: s32[1], index: 1, kind: input, shape index: {}]
  %s2 = inlined_call_operand.vmem [shape: f32[19,8], index: 2, kind: input, shape index: {}]
  %s3 = inlined_call_operand.vmem [shape: s32[1,24], index: 3, kind: input, shape index: {}]
  %s4 = inlined_call_operand.vmem [shape: s32[24,1], index: 4, kind: input, shape index: {}]
  %s5 = inlined_call_operand.vmem [shape: f32[32,16], index: 5, kind: input, shape index: {}]
  %s6 = inlined_call_operand.vmem [shape: f32[1,16], index: 6, kind: input, shape index: {}]
  %s7 = inlined_call_operand.hbm [shape: f32[4,16], index: 7, kind: output, shape index: {}]
  %s8 = sld [smem:[#allocation0]]
  $region54: #{sparse_xtoy.1} parent=0
    _
  %s10 = ssub.s32 1, %s8
  %s11 = scalar_select 0, %s10, %s8
  %12 = sst [smem:[#allocation5]] %s0
  %13 = sst [smem:[#allocation6]] %s1
  $region1: #{sparse_xtoy.1} parent=0
    #allocation7 [shape = 'u8[2048]{0}', space=vmem, size = 0x800, scoped, tag = 'output window, operand 0, single buffered']
    #allocation8 [shape = 's32[1]{0}', space=sflag, size = 0x4, scoped, tag = 'scoped memory for sparse_xtoy.1']
    %14 = vsyncpa [#allocation8], 0
    // Predicated region
    $region2: #{sparse_xtoy.1} parent=1 // pred_check
      _
    $region3: #{sparse_xtoy.1} parent=1 // pred_check_branch
      %16 = sbr.rel (0) target = $region5
    $region4: #{sparse_xtoy.1} parent=1 // pred_region
      _
    $region5: #{sparse_xtoy.1} parent=1 // pred_fallthru
      _
    // Predicated region
    $region6: #{sparse_xtoy.1} parent=1 // pred_check
      _
    $region7: #{sparse_xtoy.1} parent=1 // pred_check_branch
      %18 = sbr.rel (0) target = $region9
    $region8: #{sparse_xtoy.1} parent=1 // pred_region
      _
    $region9: #{sparse_xtoy.1} parent=1 // pred_fallthru
      _
    // Predicated region
    $region10: #{sparse_xtoy.1} parent=1 // pred_check
      _
    $region11: #{sparse_xtoy.1} parent=1 // pred_check_branch
      %20 = sbr.rel (0) target = $region13
    $region12: #{sparse_xtoy.1} parent=1 // pred_region
      _
    $region13: #{sparse_xtoy.1} parent=1 // pred_fallthru
      _
    // Predicated region
    $region14: #{sparse_xtoy.1} parent=1 // pred_check
      _
    $region15: #{sparse_xtoy.1} parent=1 // pred_check_branch
      %22 = sbr.rel (0) target = $region17
    $region16: #{sparse_xtoy.1} parent=1 // pred_region
      _
    $region17: #{sparse_xtoy.1} parent=1 // pred_fallthru
      _
    // Predicated region
    $region18: #{sparse_xtoy.1} parent=1 // pred_check
      _
    $region19: #{sparse_xtoy.1} parent=1 // pred_check_branch
      %24 = sbr.rel (0) target = $region21
    $region20: #{sparse_xtoy.1} parent=1 // pred_region
      _
    $region21: #{sparse_xtoy.1} parent=1 // pred_fallthru
      _
    %p25 = scmp.eq.s32.totalorder 0, 0
    // Predicated region
    $region22: #{sparse_xtoy.1} parent=1 // pred_check
      %p26 = pneg %p25
    $region23: #{sparse_xtoy.1} parent=1 // pred_check_branch
      %28 = sbr.rel (%p26) target = $region25
    $region24: #{sparse_xtoy.1} parent=1 // pred_region
      %vm29 = vcmask 134144
      %30 = vst.msk [vmem:[#allocation2] sm:$0xf] %vm29, 0.0
      %vm31 = vcmask 125952
      %32 = vst.msk [vmem:[#allocation3] sm:$0xf] %vm31, -inf
    $region25: #{sparse_xtoy.1} parent=1 // pred_fallthru
      _
    %v33 = vld [vmem:[%s4] sm:$0xff]
    %v34 = vld [vmem:[%s4 + $0x8] sm:$0xff]
    %v35 = vld [vmem:[%s4 + $0x10] sm:$0xff]
    %vm36 = vcmp.lt.s32.totalorder %v33, 4
    %vm37 = vcmp.lt.s32.totalorder %v34, 4
    %vm38 = vcmp.lt.s32.totalorder %v35, 4
    %v39 = vld [vmem:[%s2] sm:$0xff]
    %v40 = vld [vmem:[%s2 + $0x8] sm:$0xff]
    %v41 = vld [vmem:[%s2 + $0x10] sm:$0xff]
    %v42 = vsel %vm36, 1, 0
    %v43 = vsel %vm37, 1, 0
    %v44 = vsel %vm38, 1, 0
    %45 = vset.pattern.permute.xlu0 0
    %46 = vperm.xlu0 %45, %v42
    %v47 = vpop.permute.xlu0 %46
    %48 = vset.pattern.permute.xlu0 0
    %49 = vperm.xlu0 %48, %v43
    %v50 = vpop.permute.xlu0 %49
    %51 = vset.pattern.permute.xlu0 0
    %52 = vperm.xlu0 %51, %v44
    %v53 = vpop.permute.xlu0 %52
    %vm54 = vcmp.eq.s32.totalorder %v47, 1
    %vm55 = vcmp.eq.s32.totalorder %v50, 1
    %vm56 = vcmp.eq.s32.totalorder %v53, 1
    %v57 = vsel %vm54, %v39, 0.0
    %v58 = vsel %vm55, %v40, 0.0
    %v59 = vsel %vm56, %v41, 0.0
    %v60 = vld [vmem:[%s3] sm:$0x1]
    %v61 = vlaneseq
    %v62 = vshrl.u32 %v61, 7
    %v63 = vperm.slane %v60, 0
    %vm64 = vcmp.eq.s32.totalorder %v62, %v63
    %v65 = vsel %vm64, 1, 0
    %v66 = vcvt.s32.f32 %v65
    %v67 = vmul.f32 %v57, %v57
    %v68 = vmul.f32 %v58, %v58
    %v69 = vmul.f32 %v59, %v59
    %73 = vrot.lane.b32.xlu0 %v67, 8
    %v74 = vpop.permute.xlu0 %73
    %75 = vrot.lane.b32.xlu0 %v68, 8
    %v76 = vpop.permute.xlu0 %75
    %77 = vrot.lane.b32.xlu0 %v69, 8
    %v78 = vpop.permute.xlu0 %77
    %vm82 = vcmask 64512
    %v83 = vsel %vm82, %v57, %v74
    %v84 = vsel %vm82, %v58, %v76
    %v85 = vsel %vm82, %v59, %v78
    %vm86 = vcmask 130048
    %v87 = vsel %vm86, %v83, 1.0
    %v88 = vsel %vm86, %v84, 1.0
    %v89 = vsel %vm86, %v85, 1.0
    %v90 = vld [vmem:[#allocation2] sm:$0xf]
    %vm91 = vcmask 195584
    %v93 = vsel %vm91, %v66, 0
    %95 = vmatpush.msra.mxu0 0.0
    %96 = vmatpush.msra.mxu0 0.0
    %97 = vmatpush.msra.mxu0 0.0
    %98 = vmatpush.msra.mxu0 0.0
    %99 = vmatpush.msra.mxu0 0.0
    %100 = vmatpush.msra.mxu0 0.0
    %101 = vmatpush.msra.mxu0 0.0
    %102 = vmatpush.msra.mxu0 0.0
    %103 = vmatpush.msra.mxu0 0.0
    %104 = vmatpush.msra.mxu0 0.0
    %105 = vmatpush.msra.mxu0 0.0
    %106 = vmatpush.msra.mxu0 0.0
    %107 = vmatpush.msra.mxu0 0.0
    %108 = vmatpush.msra.mxu0 %v89
    %109 = vmatpush.msra.mxu0 %v88
    %110 = vmatpush.msra.mxu0 %v87
    %111 = vmatmul.f32.gmra.mxu0 %v93
    %v112 = vpop.f32.mrf.mxu0
    %v113 = vadd.f32 0.0, %v112
    %114 = vdwg.mxu0
    %v115 = vadd.f32 %v90, %v113
    %vm116 = vcmask 134144
    %117 = vst.msk [vmem:[#allocation2] sm:$0xf] %vm116, %v115
    %v118 = vsub.f32 0.0, %v57
    %v119 = vsub.f32 0.0, %v58
    %v120 = vsub.f32 0.0, %v59
    %124 = vrot.lane.b32.xlu0 %v118, 8
    %v125 = vpop.permute.xlu0 %124
    %126 = vrot.lane.b32.xlu0 %v119, 8
    %v127 = vpop.permute.xlu0 %126
    %128 = vrot.lane.b32.xlu0 %v120, 8
    %v129 = vpop.permute.xlu0 %128
    %v133 = vsel %vm82, %v57, %v125
    %v134 = vsel %vm82, %v58, %v127
    %v135 = vsel %vm82, %v59, %v129
    %s136 = sld [smem:[#allocation5]]
    %s137 = sld [smem:[#allocation6]]
    %p138 = scmp.le.s32.totalorder %s136, %s137
    // Predicated region
    $region26: #{sparse_xtoy.1} parent=1 // pred_check
      %p139 = pneg %p138
    $region27: #{sparse_xtoy.1} parent=1 // pred_check_branch
      %141 = sbr.rel (%p139) target = $region29
    $region28: #{sparse_xtoy.1} parent=1 // pred_region
      %v142 = vstv %s136
      %vm143 = vcmp.eq.s32.totalorder %v33, %v142
      %vm144 = vcmp.eq.s32.totalorder %v34, %v142
      %vm145 = vcmp.eq.s32.totalorder %v35, %v142
      %v146 = vsel %vm143, 1, 0
      %v147 = vsel %vm144, 1, 0
      %v148 = vsel %vm145, 1, 0
      %149 = vset.pattern.permute.xlu0 0
      %150 = vperm.xlu0 %149, %v146
      %v151 = vpop.permute.xlu0 %150
      %152 = vset.pattern.permute.xlu0 0
      %153 = vperm.xlu0 %152, %v147
      %v154 = vpop.permute.xlu0 %153
      %155 = vset.pattern.permute.xlu0 0
      %156 = vperm.xlu0 %155, %v148
      %v157 = vpop.permute.xlu0 %156
      %vm158 = vcmp.eq.s32.totalorder %v151, 1
      %vm159 = vcmp.eq.s32.totalorder %v154, 1
      %vm160 = vcmp.eq.s32.totalorder %v157, 1
      %v161 = vsel %vm158, %v133, -inf
      %v162 = vsel %vm159, %v134, -inf
      %v163 = vsel %vm160, %v135, -inf
      %v164 = vsel %vm86, %v161, -inf
      %v165 = vsel %vm86, %v162, -inf
      %v166 = vsel %vm86, %v163, -inf
      %v167 = vmax.f32 %v164, %v165
      %v168 = vmax.f32 %v167, %v166
      %v169 = vrot.slane %v168, 4
      %v170 = vmax.f32 %v168, %v169
      %v171 = vrot.slane %v170, 2
      %v172 = vmax.f32 %v170, %v171
      %v173 = vrot.slane %v172, 1
      %v174 = vmax.f32 %v172, %v173
      %s175 = scalar_lea.vmem [#allocation3], %s136
      %v176 = vld [vmem:[%s175] sm:$0x1]
      %v177 = vmax.f32 %v176, %v174
      %vm178 = vcmask 122880
      %179 = vst.msk [vmem:[%s175] sm:$0x1] %vm178, %v177
    $region29: #{sparse_xtoy.1} parent=1 // pred_fallthru
      _
    %s180 = sadd.s32 %s136, 1
    %p181 = scmp.le.s32.totalorder %s180, %s137
    // Predicated region
    $region30: #{sparse_xtoy.1} parent=1 // pred_check
      %p182 = pneg %p181
    $region31: #{sparse_xtoy.1} parent=1 // pred_check_branch
      %184 = sbr.rel (%p182) target = $region33
    $region32: #{sparse_xtoy.1} parent=1 // pred_region
      %v185 = vstv %s180
      %vm186 = vcmp.eq.s32.totalorder %v33, %v185
      %vm187 = vcmp.eq.s32.totalorder %v34, %v185
      %vm188 = vcmp.eq.s32.totalorder %v35, %v185
      %v189 = vsel %vm186, 1, 0
      %v190 = vsel %vm187, 1, 0
      %v191 = vsel %vm188, 1, 0
      %192 = vset.pattern.permute.xlu0 0
      %193 = vperm.xlu0 %192, %v189
      %v194 = vpop.permute.xlu0 %193
      %195 = vset.pattern.permute.xlu0 0
      %196 = vperm.xlu0 %195, %v190
      %v197 = vpop.permute.xlu0 %196
      %198 = vset.pattern.permute.xlu0 0
      %199 = vperm.xlu0 %198, %v191
      %v200 = vpop.permute.xlu0 %199
      %vm201 = vcmp.eq.s32.totalorder %v194, 1
      %vm202 = vcmp.eq.s32.totalorder %v197, 1
      %vm203 = vcmp.eq.s32.totalorder %v200, 1
      %v204 = vsel %vm201, %v133, -inf
      %v205 = vsel %vm202, %v134, -inf
      %v206 = vsel %vm203, %v135, -inf
      %v207 = vsel %vm86, %v204, -inf
      %v208 = vsel %vm86, %v205, -inf
      %v209 = vsel %vm86, %v206, -inf
      %v210 = vmax.f32 %v207, %v208
      %v211 = vmax.f32 %v210, %v209
      %v212 = vrot.slane %v211, 4
      %v213 = vmax.f32 %v211, %v212
      %v214 = vrot.slane %v213, 2
      %v215 = vmax.f32 %v213, %v214
      %v216 = vrot.slane %v215, 1
      %v217 = vmax.f32 %v215, %v216
      %s218 = scalar_lea.vmem [#allocation3], %s180
      %v219 = vld [vmem:[%s218] sm:$0x1]
      %v220 = vmax.f32 %v219, %v217
      %vm221 = vcmask 122880
      %222 = vst.msk [vmem:[%s218] sm:$0x1] %vm221, %v220
    $region33: #{sparse_xtoy.1} parent=1 // pred_fallthru
      _
    %s223 = sadd.s32 %s136, 2
    %p224 = scmp.le.s32.totalorder %s223, %s137
    // Predicated region
    $region34: #{sparse_xtoy.1} parent=1 // pred_check
      %p225 = pneg %p224
    $region35: #{sparse_xtoy.1} parent=1 // pred_check_branch
      %227 = sbr.rel (%p225) target = $region37
    $region36: #{sparse_xtoy.1} parent=1 // pred_region
      %v228 = vstv %s223
      %vm229 = vcmp.eq.s32.totalorder %v33, %v228
      %vm230 = vcmp.eq.s32.totalorder %v34, %v228
      %vm231 = vcmp.eq.s32.totalorder %v35, %v228
      %v232 = vsel %vm229, 1, 0
      %v233 = vsel %vm230, 1, 0
      %v234 = vsel %vm231, 1, 0
      %235 = vset.pattern.permute.xlu0 0
      %236 = vperm.xlu0 %235, %v232
      %v237 = vpop.permute.xlu0 %236
      %238 = vset.pattern.permute.xlu0 0
      %239 = vperm.xlu0 %238, %v233
      %v240 = vpop.permute.xlu0 %239
      %241 = vset.pattern.permute.xlu0 0
      %242 = vperm.xlu0 %241, %v234
      %v243 = vpop.permute.xlu0 %242
      %vm244 = vcmp.eq.s32.totalorder %v237, 1
      %vm245 = vcmp.eq.s32.totalorder %v240, 1
      %vm246 = vcmp.eq.s32.totalorder %v243, 1
      %v247 = vsel %vm244, %v133, -inf
      %v248 = vsel %vm245, %v134, -inf
      %v249 = vsel %vm246, %v135, -inf
      %v250 = vsel %vm86, %v247, -inf
      %v251 = vsel %vm86, %v248, -inf
      %v252 = vsel %vm86, %v249, -inf
      %v253 = vmax.f32 %v250, %v251
      %v254 = vmax.f32 %v253, %v252
      %v255 = vrot.slane %v254, 4
      %v256 = vmax.f32 %v254, %v255
      %v257 = vrot.slane %v256, 2
      %v258 = vmax.f32 %v256, %v257
      %v259 = vrot.slane %v258, 1
      %v260 = vmax.f32 %v258, %v259
      %s261 = scalar_lea.vmem [#allocation3], %s223
      %v262 = vld [vmem:[%s261] sm:$0x1]
      %v263 = vmax.f32 %v262, %v260
      %vm264 = vcmask 122880
      %265 = vst.msk [vmem:[%s261] sm:$0x1] %vm264, %v263
    $region37: #{sparse_xtoy.1} parent=1 // pred_fallthru
      _
    %s266 = sadd.s32 %s136, 3
    %p267 = scmp.le.s32.totalorder %s266, %s137
    // Predicated region
    $region38: #{sparse_xtoy.1} parent=1 // pred_check
      %p268 = pneg %p267
    $region39: #{sparse_xtoy.1} parent=1 // pred_check_branch
      %270 = sbr.rel (%p268) target = $region41
    $region40: #{sparse_xtoy.1} parent=1 // pred_region
      %v271 = vstv %s266
      %vm272 = vcmp.eq.s32.totalorder %v33, %v271
      %vm273 = vcmp.eq.s32.totalorder %v34, %v271
      %vm274 = vcmp.eq.s32.totalorder %v35, %v271
      %v275 = vsel %vm272, 1, 0
      %v276 = vsel %vm273, 1, 0
      %v277 = vsel %vm274, 1, 0
      %278 = vset.pattern.permute.xlu0 0
      %279 = vperm.xlu0 %278, %v275
      %v280 = vpop.permute.xlu0 %279
      %281 = vset.pattern.permute.xlu0 0
      %282 = vperm.xlu0 %281, %v276
      %v283 = vpop.permute.xlu0 %282
      %284 = vset.pattern.permute.xlu0 0
      %285 = vperm.xlu0 %284, %v277
      %v286 = vpop.permute.xlu0 %285
      %vm287 = vcmp.eq.s32.totalorder %v280, 1
      %vm288 = vcmp.eq.s32.totalorder %v283, 1
      %vm289 = vcmp.eq.s32.totalorder %v286, 1
      %v290 = vsel %vm287, %v133, -inf
      %v291 = vsel %vm288, %v134, -inf
      %v292 = vsel %vm289, %v135, -inf
      %v293 = vsel %vm86, %v290, -inf
      %v294 = vsel %vm86, %v291, -inf
      %v295 = vsel %vm86, %v292, -inf
      %v296 = vmax.f32 %v293, %v294
      %v297 = vmax.f32 %v296, %v295
      %v298 = vrot.slane %v297, 4
      %v299 = vmax.f32 %v297, %v298
      %v300 = vrot.slane %v299, 2
      %v301 = vmax.f32 %v299, %v300
      %v302 = vrot.slane %v301, 1
      %v303 = vmax.f32 %v301, %v302
      %s304 = scalar_lea.vmem [#allocation3], %s266
      %v305 = vld [vmem:[%s304] sm:$0x1]
      %v306 = vmax.f32 %v305, %v303
      %vm307 = vcmask 122880
      %308 = vst.msk [vmem:[%s304] sm:$0x1] %vm307, %v306
    $region41: #{sparse_xtoy.1} parent=1 // pred_fallthru
      _
    // Predicated region
    $region42: #{sparse_xtoy.1} parent=1 // pred_check
      %p309 = pneg %p25
    $region43: #{sparse_xtoy.1} parent=1 // pred_check_branch
      %311 = sbr.rel (%p309) target = $region45
    $region44: #{sparse_xtoy.1} parent=1 // pred_region
      %v312 = vld [vmem:[#allocation2] sm:$0xf]
      %v313 = vmax.f32 %v312, 1.0
      %v314 = vrcp.pop %v313
      %v315 = vmul.f32 %v313, %v314
      %v316 = vsub.f32 1.0, %v315
      %v317 = vmul.f32 %v314, %v316
      %v318 = vadd.f32 %v314, %v317
      %vm319 = vweird.f32 %v313
      %vm320 = vweird.f32 %v314
      %vm321 = vmor %vm319, %vm320
      %v322 = vsel %vm321, %v314, %v318
      %v323 = vand.u32 2147483647, %v313
      %vm324 = vcmp.eq.f32.partialorder %v323, 8.507059e+37
      %v325 = vand.u32 %v313, 2147483648
      %v326 = vor.u32 1.1754944e-38, %v325
      %v327 = vsel %vm324, %v326, %v322
      %v328 = vmul.f32 1.0, %v327
      %330 = vset.pattern.permute.xlu0 16
      %331 = vperm.xlu0 %330, %v328
      %v332 = vpop.permute.xlu0 %331
      %v334 = vmul.f32 %v312, %v332
      %v335 = vmul.f32 %v334, %v334
      %337 = vrot.lane.b32.xlu0 %v335, 8
      %v338 = vpop.permute.xlu0 %337
      %v340 = vsub.f32 %v334, %v338
      %v341 = vmax.f32 %v340, 0.0
      %v342 = vld [vmem:[#allocation3] sm:$0xf]
      %vm343 = vcmp.gt.f32.partialorder %v312, 0.0
      %v344 = vsel %vm343, 1, 0
      %345 = vset.pattern.permute.xlu0 16
      %346 = vperm.xlu0 %345, %v344
      %v347 = vpop.permute.xlu0 %346
      %vm348 = vcmp.eq.s32.totalorder %v347, 1
      %v349 = vsel %vm348, %v342, 0.0
      %v350 = vsub.f32 0.0, %v342
      %v351 = vsel %vm348, %v350, 0.0
      %353 = vrot.lane.b32.xlu0 %v349, 16
      %v354 = vpop.permute.xlu0 %353
      %357 = vrot.lane.b32.xlu0 %v341, 16
      %v358 = vpop.permute.xlu0 %357
      %v360 = vsel %vm82, %v334, %v351
      %v361 = vsel %vm86, %v360, %v354
      %v362 = vsel %vm91, %v361, %v358
      %v363 = vld [vmem:[%s5] sm:$0xff]
      %v364 = vld [vmem:[%s5 + $0x8] sm:$0xff]
      %v365 = vld [vmem:[%s5 + $0x10] sm:$0xff]
      %v366 = vld [vmem:[%s5 + $0x18] sm:$0xff]
      %v367 = vld [vmem:[%s6] sm:$0x1]
      %v369 = vperm.slane %v367, 0
      %vm371 = vcmask 261120
      %v373 = vsel %vm371, %v362, 0
      %375 = vmatpush.msra.mxu0 0.0
      %376 = vmatpush.msra.mxu0 0.0
      %377 = vmatpush.msra.mxu0 0.0
      %378 = vmatpush.msra.mxu0 0.0
      %379 = vmatpush.msra.mxu0 0.0
      %380 = vmatpush.msra.mxu0 0.0
      %381 = vmatpush.msra.mxu0 0.0
      %382 = vmatpush.msra.mxu0 0.0
      %383 = vmatpush.msra.mxu0 0.0
      %384 = vmatpush.msra.mxu0 0.0
      %385 = vmatpush.msra.mxu0 0.0
      %386 = vmatpush.msra.mxu0 0.0
      %387 = vmatpush.msra.mxu0 %v366
      %388 = vmatpush.msra.mxu0 %v365
      %389 = vmatpush.msra.mxu0 %v364
      %390 = vmatpush.msra.mxu0 %v363
      %391 = vmatmul.f32.gmra.mxu0 %v373
      %v392 = vpop.f32.mrf.mxu0
      %v393 = vadd.f32 %v369, %v392
      %394 = vdwg.mxu0
      %vm395 = vcmask 125952
      %396 = vst.msk [vmem:[#allocation7] sm:$0xf] %vm395, %v393
    $region45: #{sparse_xtoy.1} parent=1 // pred_fallthru
      _
    // Predicated region
    $region46: #{sparse_xtoy.1} parent=1 // pred_check
      _
    $region47: #{sparse_xtoy.1} parent=1 // pred_check_branch
      %398 = sbr.rel (0) target = $region49
    $region48: #{sparse_xtoy.1} parent=1 // pred_region
      %400 = vsyncadd [#allocation8], 0
      %s402 = sshll.u32 [#allocation7], 4
      %s403 = int_to_ptr.vmem [resolvable:$true] %s402
      %s404 = sshll.u32 %s7, 4
      %s405 = int_to_ptr.hbm [resolvable:$true] %s404
      %407 = dma.vmem_to_hbm [thread:$0]  %s403, 64, %s405, [#allocation8]
    $region49: #{sparse_xtoy.1} parent=1 // pred_fallthru
      _
    // Predicated region
    $region50: #{sparse_xtoy.1} parent=1 // pred_check
      _
    $region51: #{sparse_xtoy.1} parent=1 // pred_check_branch
      %409 = sbr.rel (0) target = $region53
    $region52: #{sparse_xtoy.1} parent=1 // pred_region
      %411 = dma.done [#allocation8], 64
    $region53: #{sparse_xtoy.1} parent=1 // pred_fallthru
      _
    %412 = vsyncpa [#allocation8], 1

</llo_original>
